<compile_context>
chip_gen: v7x
topology: tpu7x:2x2x1
jax: 0.10.0
libtpu: 0.0.40
codegen_flags: <defaults>
</compile_context>

<pallas_src>
import math
import numpy as np
import jax
import jax.numpy as jnp
from jax import lax
from jax.experimental import pallas as pl
from jax.experimental.pallas import tpu as pltpu


# Token-tile target: ~512 rows reaches ~85% of HBM roofline on v6e.  Use ~256
# on v5e (lower HBM BW) and ~256 on v7x (64 MiB VMEM) by passing tile_n.
DEFAULT_TILE_N = 512
# Set to jnp.bfloat16 on v6e/v7x for ~2x MXU rate (accumulation stays f32);
# kept f32 here so the numerical check against the f32 reference stays tight.
DEFAULT_MXU_DTYPE = jnp.float32
_VMEM_LIMIT = 48 * 1024 * 1024   # < 64 MiB physical on v7x, plenty on v5e/v6e


def _tiling(n, tile_target):
    """Pick a token tile TN (sublane/lane aligned) and the padded extent."""
    tile_target = max(128, ((tile_target + 127) // 128) * 128)
    if n <= tile_target:
        tn = max(8, ((n + 7) // 8) * 8)      # single tile covers everything
    else:
        tn = tile_target                      # multiple of 128 -> lane-dense rw
    npad = ((n + tn - 1) // tn) * tn
    return tn, npad, npad // tn


# ----------------------------------------------------------------------------
# Kernel 1: router softmax (transposed, lane-dense) + per-expert LoRA outputs
# and their per-tile Gram partials.  The expert outputs never leave VMEM.
# ----------------------------------------------------------------------------
def moe_stats_pallas(x2d, Wr, br_col, W1cat, b1cat, W2t, b2_3d, *,
                     tile_n=DEFAULT_TILE_N, mxu_dtype=DEFAULT_MXU_DTYPE):
    N, H = x2d.shape
    E, K, _ = W2t.shape
    EK = E * K
    TN, Npad, ntiles = _tiling(N, tile_n)

    xp = jnp.pad(x2d, ((0, Npad - N), (0, 0))).astype(mxu_dtype)
    n_valid = jnp.array([N], dtype=jnp.int32)

    def kernel(nv_ref, x_ref, wr_ref, br_ref, w1_ref, b1_ref, w2_ref, b2_ref,
               rwt_ref, gd_ref):
        i = pl.program_id(0)
        tn = x_ref.shape[0]
        n_exp = w2_ref.shape[0]
        k_rank = w2_ref.shape[1]

        x = x_ref[...]                                            # (TN, H)

        # Validity mask for zero-padded tail rows (kept out of the Gram).
        rows = lax.broadcasted_iota(jnp.int32, (tn, 1), 0) + i * tn
        valid = (rows < nv_ref[0]).astype(jnp.float32)            # (TN, 1)

        # Router, computed transposed so the (E, TN) store is lane-dense.
        logits_t = lax.dot_general(wr_ref[...], x, (((1,), (1,)), ((), ())),
                                   preferred_element_type=jnp.float32)
        logits_t = logits_t + br_ref[...]                         # (E, TN)
        m = jnp.max(logits_t, axis=0, keepdims=True)
        p = jnp.exp(logits_t - m)
        rwt_ref[...] = p / jnp.sum(p, axis=0, keepdims=True)

        # Experts: one fused MXU pass for all down-projections (contraction=H),
        # then per-expert rank-K up-projections (needed individually for Gram).
        h = lax.dot_general(x, w1_ref[...], (((1,), (1,)), ((), ())),
                            preferred_element_type=jnp.float32)
        h = h + b1_ref[...]                                       # (TN, E*K)
        ys = []
        for e in range(n_exp):
            h_e = h[:, e * k_rank:(e + 1) * k_rank]               # (TN, K)
            y_e = lax.dot_general(h_e.astype(w2_ref.dtype), w2_ref[e],
                                  (((1,), (0,)), ((), ())),
                                  preferred_element_type=jnp.float32)
            ys.append((y_e + b2_ref[e]) * valid)                  # (TN, H)

        # Per-tile Gram partials <y_a, y_b>: token axis reduced in-kernel; the
        # remaining (tiles, E*E, H) -> (E, E) reduction is a tiny jnp op.
        parts = []
        for a in range(n_exp):
            for b in range(n_exp):
                parts.append(jnp.sum(ys[a] * ys[b], axis=0, keepdims=True))
        gd_ref[0] = jnp.concatenate(parts, axis=0)                # (E*E, H)

    grid_spec = pltpu.PrefetchScalarGridSpec(
        num_scalar_prefetch=1,
        grid=(ntiles,),
        in_specs=[
            pl.BlockSpec((TN, H), lambda i, nv: (i, 0)),          # x tile
            pl.BlockSpec((E, H), lambda i, nv: (0, 0)),           # router W
            pl.BlockSpec((E, 1), lambda i, nv: (0, 0)),           # router b (col)
            pl.BlockSpec((EK, H), lambda i, nv: (0, 0)),          # W1 concat
            pl.BlockSpec((1, EK), lambda i, nv: (0, 0)),          # b1 concat
            pl.BlockSpec((E, K, H), lambda i, nv: (0, 0, 0)),     # W2 (E,K,H)
            pl.BlockSpec((E, 1, H), lambda i, nv: (0, 0, 0)),     # b2
        ],
        out_specs=(
            pl.BlockSpec((E, TN), lambda i, nv: (0, i)),          # rw^T (lane-dense)
            pl.BlockSpec((1, E * E, H), lambda i, nv: (i, 0, 0)), # Gram partials
        ),
    )
    rw_t, gdots = pl.pallas_call(
        kernel,
        grid_spec=grid_spec,
        out_shape=(jax.ShapeDtypeStruct((E, Npad), jnp.float32),
                   jax.ShapeDtypeStruct((ntiles, E * E, H), jnp.float32)),
        compiler_params=pltpu.CompilerParams(
            dimension_semantics=("parallel",),
            vmem_limit_bytes=_VMEM_LIMIT),
    )(n_valid, xp, Wr.astype(mxu_dtype), br_col.astype(jnp.float32),
      W1cat.astype(mxu_dtype), b1cat.astype(jnp.float32),
      W2t.astype(mxu_dtype), b2_3d.astype(jnp.float32))

    rw = rw_t[:, :N].T                                            # (N, E)
    gram = jnp.sum(gdots, axis=(0, 2)).reshape(E, E)              # (E, E)
    return rw, gram


# ----------------------------------------------------------------------------
# Kernel 2: normalized mask-gated mixture of the selected experts.  Recomputes
# routing + LoRA from x (rank-K maps are cheap) instead of reading (E, N, H)
# back from HBM; up-projection is one block-diagonal (TN,E*K)@(E*K,H) matmul.
# ----------------------------------------------------------------------------
def combine_pallas(x2d, mask_exp, Wr_exp, br_exp, W1cat, b1cat, W2cat,
                   b2exp_scaled, K, *, tile_n=DEFAULT_TILE_N,
                   mxu_dtype=DEFAULT_MXU_DTYPE):
    N, H = x2d.shape
    EK = W1cat.shape[0]
    TN, Npad, ntiles = _tiling(N, tile_n)
    xp = jnp.pad(x2d, ((0, Npad - N), (0, 0))).astype(mxu_dtype)
    kfac = float(K)

    def kernel(mask_ref, x_ref, wre_ref, bre_ref, w1_ref, b1_ref, w2_ref,
               b2_ref, out_ref):
        x = x_ref[...]                                            # (TN, H)

        # Routing probabilities over the K-expanded expert axis: each expert's
        # softmax weight appears K consecutive times, so p == rw_e / K.
        logits = lax.dot_general(x, wre_ref[...], (((1,), (1,)), ((), ())),
                                 preferred_element_type=jnp.float32)
        logits = logits + bre_ref[...]                            # (TN, E*K)
        m = jnp.max(logits, axis=-1, keepdims=True)
        p = jnp.exp(logits - m)
        p = p / jnp.sum(p, axis=-1, keepdims=True)
        sel = p * mask_ref[...]
        denom = jnp.maximum(jnp.sum(sel, axis=-1, keepdims=True), 1e-20)
        v = (sel / denom) * kfac          # v[n, e*K+k] == normalized w_{n, e}

        # LoRA experts, weighted and folded into two wide matmuls.
        h = lax.dot_general(x, w1_ref[...], (((1,), (1,)), ((), ())),
                            preferred_element_type=jnp.float32)
        h = h + b1_ref[...]                                       # (TN, E*K)
        hw = (h * v).astype(w2_ref.dtype)
        out = lax.dot_general(hw, w2_ref[...], (((1,), (0,)), ((), ())),
                              preferred_element_type=jnp.float32)
        out = out + lax.dot_general(v, b2_ref[...], (((1,), (0,)), ((), ())),
                                    preferred_element_type=jnp.float32)
        out_ref[...] = out.astype(out_ref.dtype)

    out = pl.pallas_call(
        kernel,
        grid=(ntiles,),
        in_specs=[
            pl.BlockSpec((1, EK), lambda i: (0, 0)),              # expanded mask
            pl.BlockSpec((TN, H), lambda i: (i, 0)),              # x tile
            pl.BlockSpec((EK, H), lambda i: (0, 0)),              # router W (xK)
            pl.BlockSpec((1, EK), lambda i: (0, 0)),              # router b (xK)
            pl.BlockSpec((EK, H), lambda i: (0, 0)),              # W1 concat
            pl.BlockSpec((1, EK), lambda i: (0, 0)),              # b1 concat
            pl.BlockSpec((EK, H), lambda i: (0, 0)),              # block-diag W2
            pl.BlockSpec((EK, H), lambda i: (0, 0)),              # b2 (xK, /K)
        ],
        out_specs=pl.BlockSpec((TN, H), lambda i: (i, 0)),
        out_shape=jax.ShapeDtypeStruct((Npad, H), jnp.float32),
        compiler_params=pltpu.CompilerParams(
            dimension_semantics=("parallel",),
            vmem_limit_bytes=_VMEM_LIMIT),
    )(mask_exp, xp, Wr_exp.astype(mxu_dtype), br_exp.astype(jnp.float32),
      W1cat.astype(mxu_dtype), b1cat.astype(jnp.float32),
      W2cat.astype(mxu_dtype), b2exp_scaled.astype(jnp.float32))
    return out[:N]


# ----------------------------------------------------------------------------
# Host-side glue mirroring the module's Python control flow.
# ----------------------------------------------------------------------------
def partition_experts(sim, threshold):
    n = sim.shape[0]
    visited = [False] * n
    groups = []

    def dfs(node, group):
        visited[node] = True
        group.append(node)
        for nb in range(n):
            if abs(sim[node, nb]) > threshold and not visited[nb]:
                dfs(nb, group)

    for e in range(n):
        if not visited[e]:
            g = []
            dfs(e, g)
            groups.append(g)
    return groups


def t5_lora_moe_forward(encoder_hidden_states, params, threshold, *,
                        tile_n=DEFAULT_TILE_N, mxu_dtype=DEFAULT_MXU_DTYPE):
    """Replicates T5WithLoRALayer.forward from encoder_hidden_states up to
    combined_output_weighted (the MoE-mixed encoder states)."""
    # TODO(synk): the frozen T5 encoder producing encoder_hidden_states and the
    # downstream T5 decoder / lm_head / cross-entropy loss depend on a
    # pretrained checkpoint and are not reproduced here.
    Wr, br, W1, b1, W2, b2 = params
    B, S, H = encoder_hidden_states.shape
    E, K = W1.shape[0], W1.shape[1]
    EK = E * K
    x2d = encoder_hidden_states.reshape(B * S, H)
    N = B * S

    # One-time wrapper-side weight repacking (cheap, done with plain jnp).
    W1cat = W1.reshape(EK, H)                         # row e*K+k = W1[e, k]
    b1cat = b1.reshape(1, EK)
    W2t = jnp.transpose(W2, (0, 2, 1))                # (E, K, H) == W2[e].T
    W2cat = W2t.reshape(EK, H)                        # block-diagonal fold
    br_col = br.reshape(E, 1)
    Wr_exp = jnp.repeat(Wr, K, axis=0)                # (E*K, H)
    br_exp = jnp.repeat(br, K, axis=1)                # (1, E*K)
    b2exp_scaled = jnp.repeat(b2.reshape(E, H), K, axis=0) / float(K)

    # Kernel 1: routing softmax + Gram partials (expert outputs stay in VMEM).
    rw, gram = moe_stats_pallas(x2d, Wr, br_col, W1cat, b1cat, W2t, b2,
                                tile_n=tile_n, mxu_dtype=mxu_dtype)

    # Host sync is only O(E^2): the Gram matrix and per-expert routing mass.
    per_expert = jnp.sum(rw, axis=0)                                  # (E,)
    gram_np = np.asarray(jax.device_get(gram), dtype=np.float64)
    per_expert_np = np.asarray(jax.device_get(per_expert), dtype=np.float64)

    # Cosine-similarity matrix (off-diagonal; diagonal stays 0 like torch.zeros).
    norms = np.sqrt(np.maximum(np.diag(gram_np), 0.0))
    sim = np.zeros((E, E), dtype=np.float64)
    for i in range(E):
        for j in range(i + 1, E):
            s = gram_np[i, j] / max(norms[i] * norms[j], 1e-8)
            sim[i, j] = s
            sim[j, i] = s
    rng = sim.max() - sim.min()
    norm_sim = (sim - sim.min()) / max(rng, 1e-12)

    # Group experts by similarity threshold; pick group with max routing mass.
    groups = partition_experts(norm_sim, threshold)
    best_group = max(groups, key=lambda g: float(sum(per_expert_np[i] for i in g)))

    mask_exp_np = np.zeros((1, EK), dtype=np.float32)
    for e in best_group:
        mask_exp_np[0, e * K:(e + 1) * K] = 1.0
    mask_exp = jnp.asarray(mask_exp_np)
    mask = jnp.asarray(np.ascontiguousarray(mask_exp_np[:, ::K]))     # (1, E)

    combined = combine_pallas(x2d, mask_exp, Wr_exp, br_exp, W1cat, b1cat,
                              W2cat, b2exp_scaled, K,
                              tile_n=tile_n, mxu_dtype=mxu_dtype)
    return (combined.reshape(B, S, H), rw.reshape(B, S, E), gram,
            best_group, mask)


# ----------------------------------------------------------------------------
# Deterministic parameter init (mirrors the shapes in __init__).
# ----------------------------------------------------------------------------
def init_params(key, hidden, num_experts, K):
    def kaiming_uniform(k, shape, fan_in):
        bound = math.sqrt(6.0 / fan_in)
        return jax.random.uniform(k, shape, jnp.float32, -bound, bound)

    k1, k2, k3 = jax.random.split(key, 3)
    Wr = kaiming_uniform(k1, (num_experts, hidden), hidden)       # router.weight
    br = jnp.zeros((1, num_experts), jnp.float32)                 # router.bias
    W1 = kaiming_uniform(k2, (num_experts, K, hidden), hidden)    # expert[0].weight
    b1 = jnp.zeros((num_experts, 1, K), jnp.float32)              # expert[0].bias
    W2 = kaiming_uniform(k3, (num_experts, hidden, K), K)         # expert[1].weight
    b2 = jnp.zeros((num_experts, 1, hidden), jnp.float32)         # expert[1].bias
    return Wr, br, W1, b1, W2, b2


# ----------------------------------------------------------------------------
# Pure-JAX reference (for correctness check of the Pallas kernels).
# ----------------------------------------------------------------------------
def reference(x2d, params, mask):
    Wr, br, W1, b1, W2, b2 = params
    E = Wr.shape[0]
    logits = x2d @ Wr.T + br
    rw = jax.nn.softmax(logits, axis=-1)
    eo = jnp.stack([(x2d @ W1[e].T + b1[e]) @ W2[e].T + b2[e] for e in range(E)])
    gram = eo.reshape(E, -1) @ eo.reshape(E, -1).T
    sel = rw * mask
    w = sel / jnp.sum(sel, axis=-1, keepdims=True)
    comb = sum(w[:, e:e + 1] * eo[e] for e in range(E))
    return rw, gram, comb


if __name__ == "__main__":
    B, S, H = 2, 8, 32          # batch, sequence, d_model
    num_experts, K = 4, 8       # num_experts, LoRA rank
    threshold = 0.6             # `threads` threshold for expert partitioning

    key = jax.random.PRNGKey(0)
    kx, kp = jax.random.split(key)
    # Synthetic encoder_hidden_states (stands in for the frozen T5 encoder).
    encoder_hidden_states = jax.random.normal(kx, (B, S, H), jnp.float32)
    params = init_params(kp, H, num_experts, K)

    combined, rw, gram, best_group, mask = t5_lora_moe_forward(
        encoder_hidden_states, params, threshold)
    combined = jax.block_until_ready(combined)

    # Numerical check against pure-JAX reference (same selected group/mask).
    x2d = encoder_hidden_states.reshape(B * S, H)
    rw_ref, gram_ref, comb_ref = reference(x2d, params, mask)
    assert np.allclose(np.asarray(rw).reshape(-1, num_experts),
                       np.asarray(rw_ref), rtol=1e-4, atol=1e-5)
    assert np.allclose(np.asarray(gram), np.asarray(gram_ref),
                       rtol=1e-3, atol=1e-2)
    assert np.allclose(np.asarray(combined).reshape(B * S, H),
                       np.asarray(comb_ref), rtol=1e-4, atol=1e-4)

    print("KERNEL_OK")
</pallas_src>

<mosaic_0001>
module attributes {stable_mosaic.version = 11 : i64} {
  func.func @kernel(%arg0: i32, %arg1: memref<1xi32, #tpu.memory_space<smem>>, %arg2: memref<16x32xf32, #tpu.memory_space<vmem>>, %arg3: memref<4x32xf32, #tpu.memory_space<vmem>>, %arg4: memref<4x1xf32, #tpu.memory_space<vmem>>, %arg5: memref<32x32xf32, #tpu.memory_space<vmem>>, %arg6: memref<1x32xf32, #tpu.memory_space<vmem>>, %arg7: memref<4x8x32xf32, #tpu.memory_space<vmem>>, %arg8: memref<4x1x32xf32, #tpu.memory_space<vmem>>, %arg9: memref<4x16xf32, #tpu.memory_space<vmem>>, %arg10: memref<1x16x32xf32, #tpu.memory_space<vmem>>) attributes {dimension_semantics = [#tpu.dimension_semantics<parallel>], iteration_bounds = array<i64: 1>, scalar_prefetch = 1 : i64, scratch_operands = 0 : i64, tpu.core_type = #tpu.core_type<tc>, window_params = [{transform_indices = @transform_0, window_bounds = array<i64: 16, 32>}, {pipeline_mode = #tpu.pipeline_mode<synchronous>, transform_indices = @transform_1, window_bounds = array<i64: 4, 32>}, {pipeline_mode = #tpu.pipeline_mode<synchronous>, transform_indices = @transform_2, window_bounds = array<i64: 4, 1>}, {pipeline_mode = #tpu.pipeline_mode<synchronous>, transform_indices = @transform_3, window_bounds = array<i64: 32, 32>}, {pipeline_mode = #tpu.pipeline_mode<synchronous>, transform_indices = @transform_4, window_bounds = array<i64: 1, 32>}, {pipeline_mode = #tpu.pipeline_mode<synchronous>, transform_indices = @transform_5, window_bounds = array<i64: 4, 8, 32>}, {pipeline_mode = #tpu.pipeline_mode<synchronous>, transform_indices = @transform_6, window_bounds = array<i64: 4, 1, 32>}, {transform_indices = @transform_7, window_bounds = array<i64: 4, 16>}, {transform_indices = @transform_8, window_bounds = array<i64: 1, 16, 32>}]} {
    %c0 = arith.constant 0 : index
    %c0_0 = arith.constant 0 : index
    %0 = vector.load %arg2[%c0, %c0_0] : memref<16x32xf32, #tpu.memory_space<vmem>>, vector<16x32xf32>
    %1 = tpu.iota {dimensions = array<i32: 0>} : vector<16x1xi32>
    %c16_i32 = arith.constant 16 : i32
    %2 = arith.muli %arg0, %c16_i32 : i32
    %3 = vector.broadcast %2 : i32 to vector<16x1xi32>
    %4 = arith.addi %1, %3 : vector<16x1xi32>
    %c0_1 = arith.constant 0 : index
    %5 = memref.load %arg1[%c0_1] : memref<1xi32, #tpu.memory_space<smem>>
    %6 = vector.broadcast %5 : i32 to vector<16x1xi32>
    %7 = arith.cmpi slt, %4, %6 : vector<16x1xi32>
    %8 = arith.extui %7 : vector<16x1xi1> to vector<16x1xi32>
    %9 = arith.sitofp %8 : vector<16x1xi32> to vector<16x1xf32>
    %c0_2 = arith.constant 0 : index
    %c0_3 = arith.constant 0 : index
    %10 = vector.load %arg3[%c0_2, %c0_3] : memref<4x32xf32, #tpu.memory_space<vmem>>, vector<4x32xf32>
    %cst = arith.constant dense<0.000000e+00> : vector<4x16xf32>
    %11 = tpu.matmul %10, %0, %cst {dimension_numbers = #tpu.dot_dimension_numbers<[1], [1], [0], [0], [0, 0, 1, 0], [], []>} : vector<4x32xf32>, vector<16x32xf32>, vector<4x16xf32> -> vector<4x16xf32>
    %c0_4 = arith.constant 0 : index
    %c0_5 = arith.constant 0 : index
    %12 = vector.load %arg4[%c0_4, %c0_5] : memref<4x1xf32, #tpu.memory_space<vmem>>, vector<4x1xf32>
    %13 = vector.broadcast %12 : vector<4x1xf32> to vector<4x16xf32>
    %14 = arith.addf %11, %13 : vector<4x16xf32>
    %cst_6 = arith.constant dense<0xFF800000> : vector<16xf32>
    %15 = vector.multi_reduction <maximumf>, %14, %cst_6 [0] : vector<4x16xf32> to vector<16xf32>
    %16 = vector.shape_cast %15 : vector<16xf32> to vector<1x16xf32>
    %17 = vector.broadcast %16 : vector<1x16xf32> to vector<4x16xf32>
    %18 = arith.subf %14, %17 : vector<4x16xf32>
    %19 = math.exp %18 : vector<4x16xf32>
    %cst_7 = arith.constant dense<0.000000e+00> : vector<16xf32>
    %20 = vector.multi_reduction <add>, %19, %cst_7 [0] : vector<4x16xf32> to vector<16xf32>
    %21 = vector.shape_cast %20 : vector<16xf32> to vector<1x16xf32>
    %22 = vector.broadcast %21 : vector<1x16xf32> to vector<4x16xf32>
    %23 = arith.divf %19, %22 : vector<4x16xf32>
    %c0_8 = arith.constant 0 : index
    %c0_9 = arith.constant 0 : index
    %24 = vector.load %arg9[%c0_8, %c0_9] : memref<4x16xf32, #tpu.memory_space<vmem>>, vector<4x16xf32>
    tpu.vector_store %arg9[%c0_8, %c0_9], %23 {strides = array<i32>} : memref<4x16xf32, #tpu.memory_space<vmem>>, vector<4x16xf32>,
    %c0_10 = arith.constant 0 : index
    %c0_11 = arith.constant 0 : index
    %25 = vector.load %arg5[%c0_10, %c0_11] : memref<32x32xf32, #tpu.memory_space<vmem>>, vector<32x32xf32>
    %cst_12 = arith.constant dense<0.000000e+00> : vector<16x32xf32>
    %26 = tpu.matmul %0, %25, %cst_12 {dimension_numbers = #tpu.dot_dimension_numbers<[1], [1], [0], [0], [0, 0, 1, 0], [], []>} : vector<16x32xf32>, vector<32x32xf32>, vector<16x32xf32> -> vector<16x32xf32>
    %c0_13 = arith.constant 0 : index
    %c0_14 = arith.constant 0 : index
    %27 = vector.load %arg6[%c0_13, %c0_14] : memref<1x32xf32, #tpu.memory_space<vmem>>, vector<1x32xf32>
    %28 = vector.broadcast %27 : vector<1x32xf32> to vector<16x32xf32>
    %29 = arith.addf %26, %28 : vector<16x32xf32>
    %30 = vector.extract_strided_slice %29 {offsets = [0, 0], sizes = [16, 8], strides = [1, 1]} : vector<16x32xf32> to vector<16x8xf32>
    %c0_15 = arith.constant 0 : index
    %c0_16 = arith.constant 0 : index
    %c0_17 = arith.constant 0 : index
    %31 = vector.load %arg7[%c0_15, %c0_16, %c0_17] : memref<4x8x32xf32, #tpu.memory_space<vmem>>, vector<1x8x32xf32>
    %32 = vector.shape_cast %31 : vector<1x8x32xf32> to vector<8x32xf32>
    %cst_18 = arith.constant dense<0.000000e+00> : vector<16x32xf32>
    %33 = tpu.matmul %30, %32, %cst_18 {dimension_numbers = #tpu.dot_dimension_numbers<[1], [0], [0], [1], [0, 0, 1, 1], [], []>} : vector<16x8xf32>, vector<8x32xf32>, vector<16x32xf32> -> vector<16x32xf32>
    %c0_19 = arith.constant 0 : index
    %c0_20 = arith.constant 0 : index
    %c0_21 = arith.constant 0 : index
    %34 = vector.load %arg8[%c0_19, %c0_20, %c0_21] : memref<4x1x32xf32, #tpu.memory_space<vmem>>, vector<1x1x32xf32>
    %35 = vector.shape_cast %34 : vector<1x1x32xf32> to vector<1x32xf32>
    %36 = vector.broadcast %35 : vector<1x32xf32> to vector<16x32xf32>
    %37 = arith.addf %33, %36 : vector<16x32xf32>
    %38 = vector.broadcast %9 : vector<16x1xf32> to vector<16x32xf32>
    %39 = arith.mulf %37, %38 : vector<16x32xf32>
    %40 = vector.extract_strided_slice %29 {offsets = [0, 8], sizes = [16, 8], strides = [1, 1]} : vector<16x32xf32> to vector<16x8xf32>
    %c1 = arith.constant 1 : index
    %c0_22 = arith.constant 0 : index
    %c0_23 = arith.constant 0 : index
    %41 = vector.load %arg7[%c1, %c0_22, %c0_23] : memref<4x8x32xf32, #tpu.memory_space<vmem>>, vector<1x8x32xf32>
    %42 = vector.shape_cast %41 : vector<1x8x32xf32> to vector<8x32xf32>
    %cst_24 = arith.constant dense<0.000000e+00> : vector<16x32xf32>
    %43 = tpu.matmul %40, %42, %cst_24 {dimension_numbers = #tpu.dot_dimension_numbers<[1], [0], [0], [1], [0, 0, 1, 1], [], []>} : vector<16x8xf32>, vector<8x32xf32>, vector<16x32xf32> -> vector<16x32xf32>
    %c1_25 = arith.constant 1 : index
    %c0_26 = arith.constant 0 : index
    %c0_27 = arith.constant 0 : index
    %44 = vector.load %arg8[%c1_25, %c0_26, %c0_27] : memref<4x1x32xf32, #tpu.memory_space<vmem>>, vector<1x1x32xf32>
    %45 = vector.shape_cast %44 : vector<1x1x32xf32> to vector<1x32xf32>
    %46 = vector.broadcast %45 : vector<1x32xf32> to vector<16x32xf32>
    %47 = arith.addf %43, %46 : vector<16x32xf32>
    %48 = vector.broadcast %9 : vector<16x1xf32> to vector<16x32xf32>
    %49 = arith.mulf %47, %48 : vector<16x32xf32>
    %50 = vector.extract_strided_slice %29 {offsets = [0, 16], sizes = [16, 8], strides = [1, 1]} : vector<16x32xf32> to vector<16x8xf32>
    %c2 = arith.constant 2 : index
    %c0_28 = arith.constant 0 : index
    %c0_29 = arith.constant 0 : index
    %51 = vector.load %arg7[%c2, %c0_28, %c0_29] : memref<4x8x32xf32, #tpu.memory_space<vmem>>, vector<1x8x32xf32>
    %52 = vector.shape_cast %51 : vector<1x8x32xf32> to vector<8x32xf32>
    %cst_30 = arith.constant dense<0.000000e+00> : vector<16x32xf32>
    %53 = tpu.matmul %50, %52, %cst_30 {dimension_numbers = #tpu.dot_dimension_numbers<[1], [0], [0], [1], [0, 0, 1, 1], [], []>} : vector<16x8xf32>, vector<8x32xf32>, vector<16x32xf32> -> vector<16x32xf32>
    %c2_31 = arith.constant 2 : index
    %c0_32 = arith.constant 0 : index
    %c0_33 = arith.constant 0 : index
    %54 = vector.load %arg8[%c2_31, %c0_32, %c0_33] : memref<4x1x32xf32, #tpu.memory_space<vmem>>, vector<1x1x32xf32>
    %55 = vector.shape_cast %54 : vector<1x1x32xf32> to vector<1x32xf32>
    %56 = vector.broadcast %55 : vector<1x32xf32> to vector<16x32xf32>
    %57 = arith.addf %53, %56 : vector<16x32xf32>
    %58 = vector.broadcast %9 : vector<16x1xf32> to vector<16x32xf32>
    %59 = arith.mulf %57, %58 : vector<16x32xf32>
    %60 = vector.extract_strided_slice %29 {offsets = [0, 24], sizes = [16, 8], strides = [1, 1]} : vector<16x32xf32> to vector<16x8xf32>
    %c3 = arith.constant 3 : index
    %c0_34 = arith.constant 0 : index
    %c0_35 = arith.constant 0 : index
    %61 = vector.load %arg7[%c3, %c0_34, %c0_35] : memref<4x8x32xf32, #tpu.memory_space<vmem>>, vector<1x8x32xf32>
    %62 = vector.shape_cast %61 : vector<1x8x32xf32> to vector<8x32xf32>
    %cst_36 = arith.constant dense<0.000000e+00> : vector<16x32xf32>
    %63 = tpu.matmul %60, %62, %cst_36 {dimension_numbers = #tpu.dot_dimension_numbers<[1], [0], [0], [1], [0, 0, 1, 1], [], []>} : vector<16x8xf32>, vector<8x32xf32>, vector<16x32xf32> -> vector<16x32xf32>
    %c3_37 = arith.constant 3 : index
    %c0_38 = arith.constant 0 : index
    %c0_39 = arith.constant 0 : index
    %64 = vector.load %arg8[%c3_37, %c0_38, %c0_39] : memref<4x1x32xf32, #tpu.memory_space<vmem>>, vector<1x1x32xf32>
    %65 = vector.shape_cast %64 : vector<1x1x32xf32> to vector<1x32xf32>
    %66 = vector.broadcast %65 : vector<1x32xf32> to vector<16x32xf32>
    %67 = arith.addf %63, %66 : vector<16x32xf32>
    %68 = vector.broadcast %9 : vector<16x1xf32> to vector<16x32xf32>
    %69 = arith.mulf %67, %68 : vector<16x32xf32>
    %70 = arith.mulf %39, %39 : vector<16x32xf32>
    %cst_40 = arith.constant dense<0.000000e+00> : vector<32xf32>
    %71 = vector.multi_reduction <add>, %70, %cst_40 [0] : vector<16x32xf32> to vector<32xf32>
    %72 = vector.shape_cast %71 : vector<32xf32> to vector<1x32xf32>
    %73 = arith.mulf %39, %49 : vector<16x32xf32>
    %cst_41 = arith.constant dense<0.000000e+00> : vector<32xf32>
    %74 = vector.multi_reduction <add>, %73, %cst_41 [0] : vector<16x32xf32> to vector<32xf32>
    %75 = vector.shape_cast %74 : vector<32xf32> to vector<1x32xf32>
    %76 = arith.mulf %39, %59 : vector<16x32xf32>
    %cst_42 = arith.constant dense<0.000000e+00> : vector<32xf32>
    %77 = vector.multi_reduction <add>, %76, %cst_42 [0] : vector<16x32xf32> to vector<32xf32>
    %78 = vector.shape_cast %77 : vector<32xf32> to vector<1x32xf32>
    %79 = arith.mulf %39, %69 : vector<16x32xf32>
    %cst_43 = arith.constant dense<0.000000e+00> : vector<32xf32>
    %80 = vector.multi_reduction <add>, %79, %cst_43 [0] : vector<16x32xf32> to vector<32xf32>
    %81 = vector.shape_cast %80 : vector<32xf32> to vector<1x32xf32>
    %82 = arith.mulf %49, %39 : vector<16x32xf32>
    %cst_44 = arith.constant dense<0.000000e+00> : vector<32xf32>
    %83 = vector.multi_reduction <add>, %82, %cst_44 [0] : vector<16x32xf32> to vector<32xf32>
    %84 = vector.shape_cast %83 : vector<32xf32> to vector<1x32xf32>
    %85 = arith.mulf %49, %49 : vector<16x32xf32>
    %cst_45 = arith.constant dense<0.000000e+00> : vector<32xf32>
    %86 = vector.multi_reduction <add>, %85, %cst_45 [0] : vector<16x32xf32> to vector<32xf32>
    %87 = vector.shape_cast %86 : vector<32xf32> to vector<1x32xf32>
    %88 = arith.mulf %49, %59 : vector<16x32xf32>
    %cst_46 = arith.constant dense<0.000000e+00> : vector<32xf32>
    %89 = vector.multi_reduction <add>, %88, %cst_46 [0] : vector<16x32xf32> to vector<32xf32>
    %90 = vector.shape_cast %89 : vector<32xf32> to vector<1x32xf32>
    %91 = arith.mulf %49, %69 : vector<16x32xf32>
    %cst_47 = arith.constant dense<0.000000e+00> : vector<32xf32>
    %92 = vector.multi_reduction <add>, %91, %cst_47 [0] : vector<16x32xf32> to vector<32xf32>
    %93 = vector.shape_cast %92 : vector<32xf32> to vector<1x32xf32>
    %94 = arith.mulf %59, %39 : vector<16x32xf32>
    %cst_48 = arith.constant dense<0.000000e+00> : vector<32xf32>
    %95 = vector.multi_reduction <add>, %94, %cst_48 [0] : vector<16x32xf32> to vector<32xf32>
    %96 = vector.shape_cast %95 : vector<32xf32> to vector<1x32xf32>
    %97 = arith.mulf %59, %49 : vector<16x32xf32>
    %cst_49 = arith.constant dense<0.000000e+00> : vector<32xf32>
    %98 = vector.multi_reduction <add>, %97, %cst_49 [0] : vector<16x32xf32> to vector<32xf32>
    %99 = vector.shape_cast %98 : vector<32xf32> to vector<1x32xf32>
    %100 = arith.mulf %59, %59 : vector<16x32xf32>
    %cst_50 = arith.constant dense<0.000000e+00> : vector<32xf32>
    %101 = vector.multi_reduction <add>, %100, %cst_50 [0] : vector<16x32xf32> to vector<32xf32>
    %102 = vector.shape_cast %101 : vector<32xf32> to vector<1x32xf32>
    %103 = arith.mulf %59, %69 : vector<16x32xf32>
    %cst_51 = arith.constant dense<0.000000e+00> : vector<32xf32>
    %104 = vector.multi_reduction <add>, %103, %cst_51 [0] : vector<16x32xf32> to vector<32xf32>
    %105 = vector.shape_cast %104 : vector<32xf32> to vector<1x32xf32>
    %106 = arith.mulf %69, %39 : vector<16x32xf32>
    %cst_52 = arith.constant dense<0.000000e+00> : vector<32xf32>
    %107 = vector.multi_reduction <add>, %106, %cst_52 [0] : vector<16x32xf32> to vector<32xf32>
    %108 = vector.shape_cast %107 : vector<32xf32> to vector<1x32xf32>
    %109 = arith.mulf %69, %49 : vector<16x32xf32>
    %cst_53 = arith.constant dense<0.000000e+00> : vector<32xf32>
    %110 = vector.multi_reduction <add>, %109, %cst_53 [0] : vector<16x32xf32> to vector<32xf32>
    %111 = vector.shape_cast %110 : vector<32xf32> to vector<1x32xf32>
    %112 = arith.mulf %69, %59 : vector<16x32xf32>
    %cst_54 = arith.constant dense<0.000000e+00> : vector<32xf32>
    %113 = vector.multi_reduction <add>, %112, %cst_54 [0] : vector<16x32xf32> to vector<32xf32>
    %114 = vector.shape_cast %113 : vector<32xf32> to vector<1x32xf32>
    %115 = arith.mulf %69, %69 : vector<16x32xf32>
    %cst_55 = arith.constant dense<0.000000e+00> : vector<32xf32>
    %116 = vector.multi_reduction <add>, %115, %cst_55 [0] : vector<16x32xf32> to vector<32xf32>
    %117 = vector.shape_cast %116 : vector<32xf32> to vector<1x32xf32>
    %118 = tpu.concatenate %72, %75, %78, %81, %84, %87, %90, %93, %96, %99, %102, %105, %108, %111, %114, %117 in 0 : vector<1x32xf32>, vector<1x32xf32>, vector<1x32xf32>, vector<1x32xf32>, vector<1x32xf32>, vector<1x32xf32>, vector<1x32xf32>, vector<1x32xf32>, vector<1x32xf32>, vector<1x32xf32>, vector<1x32xf32>, vector<1x32xf32>, vector<1x32xf32>, vector<1x32xf32>, vector<1x32xf32>, vector<1x32xf32> -> vector<16x32xf32>
    %c0_56 = arith.constant 0 : index
    %c0_57 = arith.constant 0 : index
    %c0_58 = arith.constant 0 : index
    %119 = vector.load %arg10[%c0_56, %c0_57, %c0_58] : memref<1x16x32xf32, #tpu.memory_space<vmem>>, vector<1x16x32xf32>
    %120 = vector.shape_cast %119 : vector<1x16x32xf32> to vector<16x32xf32>
    %121 = vector.shape_cast %118 : vector<16x32xf32> to vector<1x16x32xf32>
    tpu.vector_store %arg10[%c0_56, %c0_57, %c0_58], %121 {strides = array<i32>} : memref<1x16x32xf32, #tpu.memory_space<vmem>>, vector<1x16x32xf32>,
    return
  }
  func.func @transform_0(%arg0: i32, %arg1: memref<1xi32, #tpu.memory_space<smem>>) -> (i32, i32) {
    %c0_i32 = arith.constant 0 : i32
    %c0_i32_0 = arith.constant 0 : i32
    return %arg0, %c0_i32 : i32, i32
  }
  func.func @transform_1(%arg0: i32, %arg1: memref<1xi32, #tpu.memory_space<smem>>) -> (i32, i32) {
    %c0_i32 = arith.constant 0 : i32
    %c0_i32_0 = arith.constant 0 : i32
    %c0_i32_1 = arith.constant 0 : i32
    return %c0_i32, %c0_i32_0 : i32, i32
  }
  func.func @transform_2(%arg0: i32, %arg1: memref<1xi32, #tpu.memory_space<smem>>) -> (i32, i32) {
    %c0_i32 = arith.constant 0 : i32
    %c0_i32_0 = arith.constant 0 : i32
    %c0_i32_1 = arith.constant 0 : i32
    return %c0_i32, %c0_i32_0 : i32, i32
  }
  func.func @transform_3(%arg0: i32, %arg1: memref<1xi32, #tpu.memory_space<smem>>) -> (i32, i32) {
    %c0_i32 = arith.constant 0 : i32
    %c0_i32_0 = arith.constant 0 : i32
    %c0_i32_1 = arith.constant 0 : i32
    return %c0_i32, %c0_i32_0 : i32, i32
  }
  func.func @transform_4(%arg0: i32, %arg1: memref<1xi32, #tpu.memory_space<smem>>) -> (i32, i32) {
    %c0_i32 = arith.constant 0 : i32
    %c0_i32_0 = arith.constant 0 : i32
    %c0_i32_1 = arith.constant 0 : i32
    return %c0_i32, %c0_i32_0 : i32, i32
  }
  func.func @transform_5(%arg0: i32, %arg1: memref<1xi32, #tpu.memory_space<smem>>) -> (i32, i32, i32) {
    %c0_i32 = arith.constant 0 : i32
    %c0_i32_0 = arith.constant 0 : i32
    %c0_i32_1 = arith.constant 0 : i32
    %c0_i32_2 = arith.constant 0 : i32
    return %c0_i32, %c0_i32_0, %c0_i32_1 : i32, i32, i32
  }
  func.func @transform_6(%arg0: i32, %arg1: memref<1xi32, #tpu.memory_space<smem>>) -> (i32, i32, i32) {
    %c0_i32 = arith.constant 0 : i32
    %c0_i32_0 = arith.constant 0 : i32
    %c0_i32_1 = arith.constant 0 : i32
    %c0_i32_2 = arith.constant 0 : i32
    return %c0_i32, %c0_i32_0, %c0_i32_1 : i32, i32, i32
  }
  func.func @transform_7(%arg0: i32, %arg1: memref<1xi32, #tpu.memory_space<smem>>) -> (i32, i32) {
    %c0_i32 = arith.constant 0 : i32
    %c0_i32_0 = arith.constant 0 : i32
    return %c0_i32, %arg0 : i32, i32
  }
  func.func @transform_8(%arg0: i32, %arg1: memref<1xi32, #tpu.memory_space<smem>>) -> (i32, i32, i32) {
    %c0_i32 = arith.constant 0 : i32
    %c0_i32_0 = arith.constant 0 : i32
    %c0_i32_1 = arith.constant 0 : i32
    return %arg0, %c0_i32, %c0_i32_0 : i32, i32, i32
  }
}

</mosaic_0001>

<llo_original>
// kernel: tpu_custom_call.1
$region0: #{tpu_custom_call.1}
  #allocation0 [shape = 'u32[]', space=smem, size = 0x4, offset = 0x4, fixed_abs, tag = 'smem constant byte address 0x4 - core index']
  #allocation1 [shape = 'u32[144,128]{1,0:T(1,128)}', space=vmem, size = 0x12000, scoped, tag = 'internal scratch']
  #allocation2 [shape = 's32[1]{0}', space=sflag, size = 0x4, scoped, tag = 'scoped memory for tpu_custom_call.1']
  #allocation3 [shape = 's32[1]{0:T(128)S(6)}', space=smem, size = 0x200, scoped, tag = 'prefetched SMEM operand 0']
  %s0 = inlined_call_operand.<no memory space> [shape: s32[1], index: 0, kind: input, shape index: {}]
  %s1 = inlined_call_operand.hbm [shape: f32[16,32], index: 1, kind: input, shape index: {}]
  %s2 = inlined_call_operand.vmem [shape: f32[4,32], index: 2, kind: input, shape index: {}]
  %s3 = inlined_call_operand.vmem [shape: f32[4,1], index: 3, kind: input, shape index: {}]
  %s4 = inlined_call_operand.hbm [shape: f32[32,32], index: 4, kind: input, shape index: {}]
  %s5 = inlined_call_operand.vmem [shape: f32[1,32], index: 5, kind: input, shape index: {}]
  %s6 = inlined_call_operand.hbm [shape: f32[4,8,32], index: 6, kind: input, shape index: {}]
  %s7 = inlined_call_operand.vmem [shape: f32[4,1,32], index: 7, kind: input, shape index: {}]
  %s8 = inlined_call_operand.hbm [shape: f32[4,16], index: 8, kind: output, shape index: {0}]
  %s9 = inlined_call_operand.hbm [shape: f32[1,16,32], index: 9, kind: output, shape index: {1}]
  %10 = xla_tuple %s8, %s9
  %s11 = sld [smem:[#allocation0]]
  $region58: #{tpu_custom_call.1} parent=0
    _
  %s13 = ssub.s32 1, %s11
  %s14 = scalar_select 0, %s13, %s11
  %15 = sst [smem:[#allocation3]] %s0
  $region1: #{tpu_custom_call.1} parent=0
    #allocation4 [shape = 'u8[8192]{0}', space=vmem, size = 0x2000, scoped, tag = 'input window, operand 1, single buffered']
    #allocation5 [shape = 's32[1]{0}', space=sflag, size = 0x4, scoped, tag = 'scoped memory for tpu_custom_call.1']
    #allocation6 [shape = 's32[1]{0}', space=sflag, size = 0x4, scoped, tag = 'scoped memory for tpu_custom_call.1']
    #allocation7 [shape = 'u8[16384]{0}', space=vmem, size = 0x4000, scoped, tag = 'input window, operand 4, single buffered']
    #allocation8 [shape = 's32[1]{0}', space=sflag, size = 0x4, scoped, tag = 'scoped memory for tpu_custom_call.1']
    #allocation9 [shape = 'u8[16384]{0}', space=vmem, size = 0x4000, scoped, tag = 'input window, operand 6, single buffered']
    #allocation10 [shape = 'u8[2048]{0}', space=vmem, size = 0x800, scoped, tag = 'output window, operand 0, single buffered']
    #allocation11 [shape = 'u8[8192]{0}', space=vmem, size = 0x2000, scoped, tag = 'output window, operand 1, single buffered']
    #allocation12 [shape = 's32[1]{0}', space=sflag, size = 0x4, scoped, tag = 'scoped memory for tpu_custom_call.1']
    %16 = vsyncpa [#allocation5], 0
    %17 = vsyncpa [#allocation8], 0
    %18 = vsyncpa [#allocation6], 0
    %19 = vsyncpa [#allocation12], 0
    // Predicated region
    $region2: #{tpu_custom_call.1} parent=1 // pred_check
      _
    $region3: #{tpu_custom_call.1} parent=1 // pred_check_branch
      %21 = sbr.rel (0) target = $region5
    $region4: #{tpu_custom_call.1} parent=1 // pred_region
      %s23 = ssub.s32 256, 256
      %24 = vsyncadd [#allocation5], %s23
      %s25 = sshll.u32 [#allocation4], 4
      %s26 = int_to_ptr.vmem [resolvable:$true] %s25
      %31 = dma.hbm_to_vmem [thread:$0]  %s1, 256, %s26, [#allocation5], 128, 128, 8
    $region5: #{tpu_custom_call.1} parent=1 // pred_fallthru
      _
    // Predicated region
    $region6: #{tpu_custom_call.1} parent=1 // pred_check
      _
    $region7: #{tpu_custom_call.1} parent=1 // pred_check_branch
      %33 = sbr.rel (0) target = $region9
    $region8: #{tpu_custom_call.1} parent=1 // pred_region
      _
    $region9: #{tpu_custom_call.1} parent=1 // pred_fallthru
      _
    // Predicated region
    $region10: #{tpu_custom_call.1} parent=1 // pred_check
      _
    $region11: #{tpu_custom_call.1} parent=1 // pred_check_branch
      %35 = sbr.rel (0) target = $region13
    $region12: #{tpu_custom_call.1} parent=1 // pred_region
      _
    $region13: #{tpu_custom_call.1} parent=1 // pred_fallthru
      _
    // Predicated region
    $region14: #{tpu_custom_call.1} parent=1 // pred_check
      _
    $region15: #{tpu_custom_call.1} parent=1 // pred_check_branch
      %37 = sbr.rel (0) target = $region17
    $region16: #{tpu_custom_call.1} parent=1 // pred_region
      %s39 = ssub.s32 512, 512
      %40 = vsyncadd [#allocation8], %s39
      %s41 = sshll.u32 [#allocation7], 4
      %s42 = int_to_ptr.vmem [resolvable:$true] %s41
      %47 = dma.hbm_to_vmem [thread:$0]  %s4, 512, %s42, [#allocation8], 128, 128, 8
    $region17: #{tpu_custom_call.1} parent=1 // pred_fallthru
      _
    // Predicated region
    $region18: #{tpu_custom_call.1} parent=1 // pred_check
      _
    $region19: #{tpu_custom_call.1} parent=1 // pred_check_branch
      %49 = sbr.rel (0) target = $region21
    $region20: #{tpu_custom_call.1} parent=1 // pred_region
      _
    $region21: #{tpu_custom_call.1} parent=1 // pred_fallthru
      _
    // Predicated region
    $region22: #{tpu_custom_call.1} parent=1 // pred_check
      _
    $region23: #{tpu_custom_call.1} parent=1 // pred_check_branch
      %51 = sbr.rel (0) target = $region25
    $region24: #{tpu_custom_call.1} parent=1 // pred_region
      %s53 = ssub.s32 512, 512
      %54 = vsyncadd [#allocation8], %s53
      %s55 = sshll.u32 [#allocation9], 4
      %s56 = int_to_ptr.vmem [resolvable:$true] %s55
      %61 = dma.hbm_to_vmem [thread:$0]  %s6, 512, %s56, [#allocation8], 128, 128, 8
    $region25: #{tpu_custom_call.1} parent=1 // pred_fallthru
      _
    // Predicated region
    $region26: #{tpu_custom_call.1} parent=1 // pred_check
      _
    $region27: #{tpu_custom_call.1} parent=1 // pred_check_branch
      %63 = sbr.rel (0) target = $region29
    $region28: #{tpu_custom_call.1} parent=1 // pred_region
      _
    $region29: #{tpu_custom_call.1} parent=1 // pred_fallthru
      _
    // Predicated region
    $region30: #{tpu_custom_call.1} parent=1 // pred_check
      _
    $region31: #{tpu_custom_call.1} parent=1 // pred_check_branch
      %65 = sbr.rel (0) target = $region33
    $region32: #{tpu_custom_call.1} parent=1 // pred_region
      %66 = dma.done [#allocation5], 256
    $region33: #{tpu_custom_call.1} parent=1 // pred_fallthru
      _
    // Predicated region
    $region34: #{tpu_custom_call.1} parent=1 // pred_check
      _
    $region35: #{tpu_custom_call.1} parent=1 // pred_check_branch
      %68 = sbr.rel (0) target = $region37
    $region36: #{tpu_custom_call.1} parent=1 // pred_region
      %69 = dma.done [#allocation8], 512
    $region37: #{tpu_custom_call.1} parent=1 // pred_fallthru
      _
    // Predicated region
    $region38: #{tpu_custom_call.1} parent=1 // pred_check
      _
    $region39: #{tpu_custom_call.1} parent=1 // pred_check_branch
      %71 = sbr.rel (0) target = $region41
    $region40: #{tpu_custom_call.1} parent=1 // pred_region
      %72 = dma.done [#allocation8], 512
    $region41: #{tpu_custom_call.1} parent=1 // pred_fallthru
      _
    %v73 = vld [vmem:[#allocation4] sm:$0xff]
    %v74 = vld [vmem:[#allocation4 + $0x8] sm:$0xff]
    %v75 = vlaneseq
    %v76 = vshrl.u32 %v75, 7
    %v77 = vadd.s32 %v76, 8
    %s78 = smul.u32 0, 16
    %v79 = vstv %s78
    %v80 = vadd.s32 %v76, %v79
    %v81 = vadd.s32 %v77, %v79
    %s82 = sld [smem:[#allocation3]]
    %v83 = vstv %s82
    %vm84 = vcmp.lt.s32.totalorder %v80, %v83
    %vm85 = vcmp.lt.s32.totalorder %v81, %v83
    %v86 = vsel %vm84, 1, 0
    %v87 = vsel %vm85, 1, 0
    %v88 = vcvt.s32.f32 %v86
    %v89 = vcvt.s32.f32 %v87
    %v90 = vld [vmem:[%s2] sm:$0xf]
    %v91 = vld [vmem:[%s3] sm:$0xf]
    %93 = vset.pattern.permute.xlu0 0
    %94 = vperm.xlu0 %93, %v91
    %v95 = vpop.permute.xlu0 %94
    %vm97 = vcmask 261120
    %v99 = vsel %vm97, %v90, 0
    %v102 = vsel %vm97, %v73, 0
    %v105 = vsel %vm97, %v74, 0
    %107 = vmatprep.subr.mxu0 0.0
    %108 = vmatpush1.xpose.msra.mxu0 %v102
    %109 = vmatprep.subr.mxu0 0.0
    %110 = vmatpush1.xpose.msra.mxu0 %v105
    %111 = vmatprep.subr.mxu0 0.0
    %112 = vmatpush1.xpose.msra.mxu0 0.0
    %113 = vmatprep.subr.mxu0 0.0
    %114 = vmatpush1.xpose.msra.mxu0 0.0
    %115 = vmatprep.subr.mxu0 0.0
    %116 = vmatpush1.xpose.msra.mxu0 0.0
    %117 = vmatprep.subr.mxu0 0.0
    %118 = vmatpush1.xpose.msra.mxu0 0.0
    %119 = vmatprep.subr.mxu0 0.0
    %120 = vmatpush1.xpose.msra.mxu0 0.0
    %121 = vmatprep.subr.mxu0 0.0
    %122 = vmatpush1.xpose.msra.mxu0 0.0
    %123 = vmatprep.subr.mxu0 0.0
    %124 = vmatpush1.xpose.msra.mxu0 0.0
    %125 = vmatprep.subr.mxu0 0.0
    %126 = vmatpush1.xpose.msra.mxu0 0.0
    %127 = vmatprep.subr.mxu0 0.0
    %128 = vmatpush1.xpose.msra.mxu0 0.0
    %129 = vmatprep.subr.mxu0 0.0
    %130 = vmatpush1.xpose.msra.mxu0 0.0
    %131 = vmatprep.subr.mxu0 0.0
    %132 = vmatpush1.xpose.msra.mxu0 0.0
    %133 = vmatprep.subr.mxu0 0.0
    %134 = vmatpush1.xpose.msra.mxu0 0.0
    %135 = vmatprep.subr.mxu0 0.0
    %136 = vmatpush1.xpose.msra.mxu0 0.0
    %137 = vmatprep.subr.mxu0 0.0
    %138 = vmatpush1.xpose.msra.mxu0 0.0
    %139 = vmatprep.subr.mxu0 0.0
    %140 = vmatpush1.xpose.msra.mxu0 0.0
    %141 = vmatprep.subr.mxu0 0.0
    %142 = vmatpush1.xpose.msra.mxu0 0.0
    %143 = vmatprep.subr.mxu0 0.0
    %144 = vmatpush1.xpose.msra.mxu0 0.0
    %145 = vmatprep.subr.mxu0 0.0
    %146 = vmatpush1.xpose.msra.mxu0 0.0
    %147 = vmatprep.subr.mxu0 0.0
    %148 = vmatpush1.xpose.msra.mxu0 0.0
    %149 = vmatprep.subr.mxu0 0.0
    %150 = vmatpush1.xpose.msra.mxu0 0.0
    %151 = vmatprep.subr.mxu0 0.0
    %152 = vmatpush1.xpose.msra.mxu0 0.0
    %153 = vmatprep.subr.mxu0 0.0
    %154 = vmatpush1.xpose.msra.mxu0 0.0
    %155 = vmatprep.subr.mxu0 0.0
    %156 = vmatpush1.xpose.msra.mxu0 0.0
    %157 = vmatprep.subr.mxu0 0.0
    %158 = vmatpush1.xpose.msra.mxu0 0.0
    %159 = vmatprep.subr.mxu0 0.0
    %160 = vmatpush1.xpose.msra.mxu0 0.0
    %161 = vmatprep.subr.mxu0 0.0
    %162 = vmatpush1.xpose.msra.mxu0 0.0
    %163 = vmatprep.subr.mxu0 0.0
    %164 = vmatpush1.xpose.msra.mxu0 0.0
    %165 = vmatprep.subr.mxu0 0.0
    %166 = vmatpush1.xpose.msra.mxu0 0.0
    %167 = vmatprep.subr.mxu0 0.0
    %168 = vmatpush1.xpose.msra.mxu0 0.0
    %169 = vmatprep.subr.mxu0 0.0
    %170 = vmatpush1.xpose.msra.mxu0 0.0
    %171 = vmatprep.mubr.f32.mxu0 0.0
    %172 = vmatmul.mubr.f32.gmra.mrb[0].mxu0 %v99
    %v173 = vpop.f32.mrb[0].mxu0
    %v174 = vadd.f32 %v95, %v173
    %v175 = vpop.f32.mrb[0].mxu0
    %176 = vdwg.mxu0
    %vm177 = vcmask 125952
    %v178 = vsel %vm177, %v174, -inf
    %v179 = vrot.slane %v178, 4
    %v180 = vmax.f32 %v178, %v179
    %v181 = vrot.slane %v180, 2
    %v182 = vmax.f32 %v180, %v181
    %v183 = vrot.slane %v182, 1
    %v184 = vmax.f32 %v182, %v183
    %v185 = vsub.f32 %v174, %v184
    %v186 = vmul.f32 %v185, 1.442695
    %v187 = vpow.pop %v186
    %v188 = vsel %vm177, %v187, 0.0
    %v189 = vrot.slane %v188, 4
    %v190 = vadd.f32 %v188, %v189
    %v191 = vrot.slane %v190, 2
    %v192 = vadd.f32 %v190, %v191
    %v193 = vrot.slane %v192, 1
    %v194 = vadd.f32 %v192, %v193
    %v195 = vrcp.pop %v194
    %v196 = vmul.f32 %v187, %v195
    %197 = vst.msk [vmem:[#allocation10] sm:$0xf] %vm177, %v196
    %v198 = vld [vmem:[#allocation7] sm:$0xff]
    %v199 = vld [vmem:[#allocation7 + $0x8] sm:$0xff]
    %v200 = vld [vmem:[#allocation7 + $0x10] sm:$0xff]
    %v201 = vld [vmem:[#allocation7 + $0x18] sm:$0xff]
    %v202 = vld [vmem:[%s5] sm:$0x1]
    %v204 = vlaneseq
    %v205 = vshrl.u32 %v204, 7
    %v206 = vsub.s32 0, %v205
    %v207 = vrot.slane %v202, %v206
    %v210 = vsel %vm97, %v198, 0
    %v213 = vsel %vm97, %v199, 0
    %v216 = vsel %vm97, %v200, 0
    %v219 = vsel %vm97, %v201, 0
    %221 = vmatprep.subr.mxu0 0.0
    %222 = vmatpush1.xpose.msra.mxu0 %v210
    %223 = vmatprep.subr.mxu0 0.0
    %224 = vmatpush1.xpose.msra.mxu0 %v213
    %225 = vmatprep.subr.mxu0 0.0
    %226 = vmatpush1.xpose.msra.mxu0 %v216
    %227 = vmatprep.subr.mxu0 0.0
    %228 = vmatpush1.xpose.msra.mxu0 %v219
    %229 = vmatprep.subr.mxu0 0.0
    %230 = vmatpush1.xpose.msra.mxu0 0.0
    %231 = vmatprep.subr.mxu0 0.0
    %232 = vmatpush1.xpose.msra.mxu0 0.0
    %233 = vmatprep.subr.mxu0 0.0
    %234 = vmatpush1.xpose.msra.mxu0 0.0
    %235 = vmatprep.subr.mxu0 0.0
    %236 = vmatpush1.xpose.msra.mxu0 0.0
    %237 = vmatprep.subr.mxu0 0.0
    %238 = vmatpush1.xpose.msra.mxu0 0.0
    %239 = vmatprep.subr.mxu0 0.0
    %240 = vmatpush1.xpose.msra.mxu0 0.0
    %241 = vmatprep.subr.mxu0 0.0
    %242 = vmatpush1.xpose.msra.mxu0 0.0
    %243 = vmatprep.subr.mxu0 0.0
    %244 = vmatpush1.xpose.msra.mxu0 0.0
    %245 = vmatprep.subr.mxu0 0.0
    %246 = vmatpush1.xpose.msra.mxu0 0.0
    %247 = vmatprep.subr.mxu0 0.0
    %248 = vmatpush1.xpose.msra.mxu0 0.0
    %249 = vmatprep.subr.mxu0 0.0
    %250 = vmatpush1.xpose.msra.mxu0 0.0
    %251 = vmatprep.subr.mxu0 0.0
    %252 = vmatpush1.xpose.msra.mxu0 0.0
    %253 = vmatprep.subr.mxu0 0.0
    %254 = vmatpush1.xpose.msra.mxu0 0.0
    %255 = vmatprep.subr.mxu0 0.0
    %256 = vmatpush1.xpose.msra.mxu0 0.0
    %257 = vmatprep.subr.mxu0 0.0
    %258 = vmatpush1.xpose.msra.mxu0 0.0
    %259 = vmatprep.subr.mxu0 0.0
    %260 = vmatpush1.xpose.msra.mxu0 0.0
    %261 = vmatprep.subr.mxu0 0.0
    %262 = vmatpush1.xpose.msra.mxu0 0.0
    %263 = vmatprep.subr.mxu0 0.0
    %264 = vmatpush1.xpose.msra.mxu0 0.0
    %265 = vmatprep.subr.mxu0 0.0
    %266 = vmatpush1.xpose.msra.mxu0 0.0
    %267 = vmatprep.subr.mxu0 0.0
    %268 = vmatpush1.xpose.msra.mxu0 0.0
    %269 = vmatprep.subr.mxu0 0.0
    %270 = vmatpush1.xpose.msra.mxu0 0.0
    %271 = vmatprep.subr.mxu0 0.0
    %272 = vmatpush1.xpose.msra.mxu0 0.0
    %273 = vmatprep.subr.mxu0 0.0
    %274 = vmatpush1.xpose.msra.mxu0 0.0
    %275 = vmatprep.subr.mxu0 0.0
    %276 = vmatpush1.xpose.msra.mxu0 0.0
    %277 = vmatprep.subr.mxu0 0.0
    %278 = vmatpush1.xpose.msra.mxu0 0.0
    %279 = vmatprep.subr.mxu0 0.0
    %280 = vmatpush1.xpose.msra.mxu0 0.0
    %281 = vmatprep.subr.mxu0 0.0
    %282 = vmatpush1.xpose.msra.mxu0 0.0
    %283 = vmatprep.subr.mxu0 0.0
    %284 = vmatpush1.xpose.msra.mxu0 0.0
    %285 = vmatprep.mubr.f32.mxu0 0.0
    %286 = vmatmul.mubr.f32.gmra.mrb[0].mxu0 %v102
    %v287 = vpop.f32.mrb[0].mxu0
    %v288 = vadd.f32 %v207, %v287
    %v289 = vpop.f32.mrb[0].mxu0
    %290 = vmatprep.mubr.f32.mxu0 0.0
    %291 = vmatmul.mubr.f32.gmra.mrb[0].mxu0 %v105
    %v292 = vpop.f32.mrb[0].mxu0
    %v293 = vadd.f32 %v207, %v292
    %v294 = vpop.f32.mrb[0].mxu0
    %295 = vdwg.mxu0
    %v296 = vld [vmem:[#allocation9] sm:$0xff]
    %v297 = vld [vmem:[%s7] sm:$0x1]
    %v299 = vlaneseq
    %v300 = vshrl.u32 %v299, 7
    %v301 = vsub.s32 0, %v300
    %v302 = vrot.slane %v297, %v301
    %vm304 = vcmask 64512
    %v306 = vsel %vm304, %v288, 0
    %v309 = vsel %vm304, %v293, 0
    %311 = vmatprep.subr.mxu0 0.0
    %312 = vmatpush1.msra.mxu0 %v296
    %313 = vmatprep.subr.mxu0 0.0
    %314 = vmatpush1.msra.mxu0 0.0
    %315 = vmatprep.subr.mxu0 0.0
    %316 = vmatpush1.msra.mxu0 0.0
    %317 = vmatprep.subr.mxu0 0.0
    %318 = vmatpush1.msra.mxu0 0.0
    %319 = vmatprep.subr.mxu0 0.0
    %320 = vmatpush1.msra.mxu0 0.0
    %321 = vmatprep.subr.mxu0 0.0
    %322 = vmatpush1.msra.mxu0 0.0
    %323 = vmatprep.subr.mxu0 0.0
    %324 = vmatpush1.msra.mxu0 0.0
    %325 = vmatprep.subr.mxu0 0.0
    %326 = vmatpush1.msra.mxu0 0.0
    %327 = vmatprep.subr.mxu0 0.0
    %328 = vmatpush1.msra.mxu0 0.0
    %329 = vmatprep.subr.mxu0 0.0
    %330 = vmatpush1.msra.mxu0 0.0
    %331 = vmatprep.subr.mxu0 0.0
    %332 = vmatpush1.msra.mxu0 0.0
    %333 = vmatprep.subr.mxu0 0.0
    %334 = vmatpush1.msra.mxu0 0.0
    %335 = vmatprep.subr.mxu0 0.0
    %336 = vmatpush1.msra.mxu0 0.0
    %337 = vmatprep.subr.mxu0 0.0
    %338 = vmatpush1.msra.mxu0 0.0
    %339 = vmatprep.subr.mxu0 0.0
    %340 = vmatpush1.msra.mxu0 0.0
    %341 = vmatprep.subr.mxu0 0.0
    %342 = vmatpush1.msra.mxu0 0.0
    %343 = vmatprep.subr.mxu0 0.0
    %344 = vmatpush1.msra.mxu0 0.0
    %345 = vmatprep.subr.mxu0 0.0
    %346 = vmatpush1.msra.mxu0 0.0
    %347 = vmatprep.subr.mxu0 0.0
    %348 = vmatpush1.msra.mxu0 0.0
    %349 = vmatprep.subr.mxu0 0.0
    %350 = vmatpush1.msra.mxu0 0.0
    %351 = vmatprep.subr.mxu0 0.0
    %352 = vmatpush1.msra.mxu0 0.0
    %353 = vmatprep.subr.mxu0 0.0
    %354 = vmatpush1.msra.mxu0 0.0
    %355 = vmatprep.subr.mxu0 0.0
    %356 = vmatpush1.msra.mxu0 0.0
    %357 = vmatprep.subr.mxu0 0.0
    %358 = vmatpush1.msra.mxu0 0.0
    %359 = vmatprep.subr.mxu0 0.0
    %360 = vmatpush1.msra.mxu0 0.0
    %361 = vmatprep.subr.mxu0 0.0
    %362 = vmatpush1.msra.mxu0 0.0
    %363 = vmatprep.subr.mxu0 0.0
    %364 = vmatpush1.msra.mxu0 0.0
    %365 = vmatprep.subr.mxu0 0.0
    %366 = vmatpush1.msra.mxu0 0.0
    %367 = vmatprep.subr.mxu0 0.0
    %368 = vmatpush1.msra.mxu0 0.0
    %369 = vmatprep.subr.mxu0 0.0
    %370 = vmatpush1.msra.mxu0 0.0
    %371 = vmatprep.subr.mxu0 0.0
    %372 = vmatpush1.msra.mxu0 0.0
    %373 = vmatprep.subr.mxu0 0.0
    %374 = vmatpush1.msra.mxu0 0.0
    %375 = vmatprep.mubr.f32.mxu0 0.0
    %376 = vmatmul.mubr.f32.gmra.mrb[0].mxu0 %v306
    %v377 = vpop.f32.mrb[0].mxu0
    %v378 = vadd.f32 %v302, %v377
    %v379 = vpop.f32.mrb[0].mxu0
    %380 = vmatprep.mubr.f32.mxu0 0.0
    %381 = vmatmul.mubr.f32.gmra.mrb[0].mxu0 %v309
    %v382 = vpop.f32.mrb[0].mxu0
    %v383 = vadd.f32 %v302, %v382
    %v384 = vpop.f32.mrb[0].mxu0
    %385 = vdwg.mxu0
    %v386 = vmul.f32 %v378, %v88
    %v387 = vmul.f32 %v383, %v89
    %s388 = scalar_lea.vmem [#allocation9], 8
    %v389 = vld [vmem:[%s388] sm:$0xff]
    %s390 = scalar_lea.vmem %s7, 1
    %v391 = vld [vmem:[%s390] sm:$0x1]
    %v393 = vlaneseq
    %v394 = vshrl.u32 %v393, 7
    %v395 = vsub.s32 0, %v394
    %v396 = vrot.slane %v391, %v395
    %398 = vrot.lane.b32.xlu0 %v288, 120
    %v399 = vpop.permute.xlu0 %398
    %400 = vrot.lane.b32.xlu0 %v293, 120
    %v401 = vpop.permute.xlu0 %400
    %v402 = vsel %vm304, %v399, 0
    %v404 = vsel %vm304, %v401, 0
    %406 = vmatprep.subr.mxu0 0.0
    %407 = vmatpush1.msra.mxu0 %v389
    %408 = vmatprep.subr.mxu0 0.0
    %409 = vmatpush1.msra.mxu0 0.0
    %410 = vmatprep.subr.mxu0 0.0
    %411 = vmatpush1.msra.mxu0 0.0
    %412 = vmatprep.subr.mxu0 0.0
    %413 = vmatpush1.msra.mxu0 0.0
    %414 = vmatprep.subr.mxu0 0.0
    %415 = vmatpush1.msra.mxu0 0.0
    %416 = vmatprep.subr.mxu0 0.0
    %417 = vmatpush1.msra.mxu0 0.0
    %418 = vmatprep.subr.mxu0 0.0
    %419 = vmatpush1.msra.mxu0 0.0
    %420 = vmatprep.subr.mxu0 0.0
    %421 = vmatpush1.msra.mxu0 0.0
    %422 = vmatprep.subr.mxu0 0.0
    %423 = vmatpush1.msra.mxu0 0.0
    %424 = vmatprep.subr.mxu0 0.0
    %425 = vmatpush1.msra.mxu0 0.0
    %426 = vmatprep.subr.mxu0 0.0
    %427 = vmatpush1.msra.mxu0 0.0
    %428 = vmatprep.subr.mxu0 0.0
    %429 = vmatpush1.msra.mxu0 0.0
    %430 = vmatprep.subr.mxu0 0.0
    %431 = vmatpush1.msra.mxu0 0.0
    %432 = vmatprep.subr.mxu0 0.0
    %433 = vmatpush1.msra.mxu0 0.0
    %434 = vmatprep.subr.mxu0 0.0
    %435 = vmatpush1.msra.mxu0 0.0
    %436 = vmatprep.subr.mxu0 0.0
    %437 = vmatpush1.msra.mxu0 0.0
    %438 = vmatprep.subr.mxu0 0.0
    %439 = vmatpush1.msra.mxu0 0.0
    %440 = vmatprep.subr.mxu0 0.0
    %441 = vmatpush1.msra.mxu0 0.0
    %442 = vmatprep.subr.mxu0 0.0
    %443 = vmatpush1.msra.mxu0 0.0
    %444 = vmatprep.subr.mxu0 0.0
    %445 = vmatpush1.msra.mxu0 0.0
    %446 = vmatprep.subr.mxu0 0.0
    %447 = vmatpush1.msra.mxu0 0.0
    %448 = vmatprep.subr.mxu0 0.0
    %449 = vmatpush1.msra.mxu0 0.0
    %450 = vmatprep.subr.mxu0 0.0
    %451 = vmatpush1.msra.mxu0 0.0
    %452 = vmatprep.subr.mxu0 0.0
    %453 = vmatpush1.msra.mxu0 0.0
    %454 = vmatprep.subr.mxu0 0.0
    %455 = vmatpush1.msra.mxu0 0.0
    %456 = vmatprep.subr.mxu0 0.0
    %457 = vmatpush1.msra.mxu0 0.0
    %458 = vmatprep.subr.mxu0 0.0
    %459 = vmatpush1.msra.mxu0 0.0
    %460 = vmatprep.subr.mxu0 0.0
    %461 = vmatpush1.msra.mxu0 0.0
    %462 = vmatprep.subr.mxu0 0.0
    %463 = vmatpush1.msra.mxu0 0.0
    %464 = vmatprep.subr.mxu0 0.0
    %465 = vmatpush1.msra.mxu0 0.0
    %466 = vmatprep.subr.mxu0 0.0
    %467 = vmatpush1.msra.mxu0 0.0
    %468 = vmatprep.subr.mxu0 0.0
    %469 = vmatpush1.msra.mxu0 0.0
    %470 = vmatprep.mubr.f32.mxu0 0.0
    %471 = vmatmul.mubr.f32.gmra.mrb[0].mxu0 %v402
    %v472 = vpop.f32.mrb[0].mxu0
    %v473 = vadd.f32 %v396, %v472
    %v474 = vpop.f32.mrb[0].mxu0
    %475 = vmatprep.mubr.f32.mxu0 0.0
    %476 = vmatmul.mubr.f32.gmra.mrb[0].mxu0 %v404
    %v477 = vpop.f32.mrb[0].mxu0
    %v478 = vadd.f32 %v396, %v477
    %v479 = vpop.f32.mrb[0].mxu0
    %480 = vdwg.mxu0
    %v481 = vmul.f32 %v473, %v88
    %v482 = vmul.f32 %v478, %v89
    %s483 = scalar_lea.vmem [#allocation9], 16
    %v484 = vld [vmem:[%s483] sm:$0xff]
    %s485 = scalar_lea.vmem %s7, 2
    %v486 = vld [vmem:[%s485] sm:$0x1]
    %v488 = vlaneseq
    %v489 = vshrl.u32 %v488, 7
    %v490 = vsub.s32 0, %v489
    %v491 = vrot.slane %v486, %v490
    %493 = vrot.lane.b32.xlu0 %v288, 112
    %v494 = vpop.permute.xlu0 %493
    %495 = vrot.lane.b32.xlu0 %v293, 112
    %v496 = vpop.permute.xlu0 %495
    %v497 = vsel %vm304, %v494, 0
    %v499 = vsel %vm304, %v496, 0
    %501 = vmatprep.subr.mxu0 0.0
    %502 = vmatpush1.msra.mxu0 %v484
    %503 = vmatprep.subr.mxu0 0.0
    %504 = vmatpush1.msra.mxu0 0.0
    %505 = vmatprep.subr.mxu0 0.0
    %506 = vmatpush1.msra.mxu0 0.0
    %507 = vmatprep.subr.mxu0 0.0
    %508 = vmatpush1.msra.mxu0 0.0
    %509 = vmatprep.subr.mxu0 0.0
    %510 = vmatpush1.msra.mxu0 0.0
    %511 = vmatprep.subr.mxu0 0.0
    %512 = vmatpush1.msra.mxu0 0.0
    %513 = vmatprep.subr.mxu0 0.0
    %514 = vmatpush1.msra.mxu0 0.0
    %515 = vmatprep.subr.mxu0 0.0
    %516 = vmatpush1.msra.mxu0 0.0
    %517 = vmatprep.subr.mxu0 0.0
    %518 = vmatpush1.msra.mxu0 0.0
    %519 = vmatprep.subr.mxu0 0.0
    %520 = vmatpush1.msra.mxu0 0.0
    %521 = vmatprep.subr.mxu0 0.0
    %522 = vmatpush1.msra.mxu0 0.0
    %523 = vmatprep.subr.mxu0 0.0
    %524 = vmatpush1.msra.mxu0 0.0
    %525 = vmatprep.subr.mxu0 0.0
    %526 = vmatpush1.msra.mxu0 0.0
    %527 = vmatprep.subr.mxu0 0.0
    %528 = vmatpush1.msra.mxu0 0.0
    %529 = vmatprep.subr.mxu0 0.0
    %530 = vmatpush1.msra.mxu0 0.0
    %531 = vmatprep.subr.mxu0 0.0
    %532 = vmatpush1.msra.mxu0 0.0
    %533 = vmatprep.subr.mxu0 0.0
    %534 = vmatpush1.msra.mxu0 0.0
    %535 = vmatprep.subr.mxu0 0.0
    %536 = vmatpush1.msra.mxu0 0.0
    %537 = vmatprep.subr.mxu0 0.0
    %538 = vmatpush1.msra.mxu0 0.0
    %539 = vmatprep.subr.mxu0 0.0
    %540 = vmatpush1.msra.mxu0 0.0
    %541 = vmatprep.subr.mxu0 0.0
    %542 = vmatpush1.msra.mxu0 0.0
    %543 = vmatprep.subr.mxu0 0.0
    %544 = vmatpush1.msra.mxu0 0.0
    %545 = vmatprep.subr.mxu0 0.0
    %546 = vmatpush1.msra.mxu0 0.0
    %547 = vmatprep.subr.mxu0 0.0
    %548 = vmatpush1.msra.mxu0 0.0
    %549 = vmatprep.subr.mxu0 0.0
    %550 = vmatpush1.msra.mxu0 0.0
    %551 = vmatprep.subr.mxu0 0.0
    %552 = vmatpush1.msra.mxu0 0.0
    %553 = vmatprep.subr.mxu0 0.0
    %554 = vmatpush1.msra.mxu0 0.0
    %555 = vmatprep.subr.mxu0 0.0
    %556 = vmatpush1.msra.mxu0 0.0
    %557 = vmatprep.subr.mxu0 0.0
    %558 = vmatpush1.msra.mxu0 0.0
    %559 = vmatprep.subr.mxu0 0.0
    %560 = vmatpush1.msra.mxu0 0.0
    %561 = vmatprep.subr.mxu0 0.0
    %562 = vmatpush1.msra.mxu0 0.0
    %563 = vmatprep.subr.mxu0 0.0
    %564 = vmatpush1.msra.mxu0 0.0
    %565 = vmatprep.mubr.f32.mxu0 0.0
    %566 = vmatmul.mubr.f32.gmra.mrb[0].mxu0 %v497
    %v567 = vpop.f32.mrb[0].mxu0
    %v568 = vadd.f32 %v491, %v567
    %v569 = vpop.f32.mrb[0].mxu0
    %570 = vmatprep.mubr.f32.mxu0 0.0
    %571 = vmatmul.mubr.f32.gmra.mrb[0].mxu0 %v499
    %v572 = vpop.f32.mrb[0].mxu0
    %v573 = vadd.f32 %v491, %v572
    %v574 = vpop.f32.mrb[0].mxu0
    %575 = vdwg.mxu0
    %v576 = vmul.f32 %v568, %v88
    %v577 = vmul.f32 %v573, %v89
    %s578 = scalar_lea.vmem [#allocation9], 24
    %v579 = vld [vmem:[%s578] sm:$0xff]
    %s580 = scalar_lea.vmem %s7, 3
    %v581 = vld [vmem:[%s580] sm:$0x1]
    %v583 = vlaneseq
    %v584 = vshrl.u32 %v583, 7
    %v585 = vsub.s32 0, %v584
    %v586 = vrot.slane %v581, %v585
    %588 = vrot.lane.b32.xlu0 %v288, 104
    %v589 = vpop.permute.xlu0 %588
    %590 = vrot.lane.b32.xlu0 %v293, 104
    %v591 = vpop.permute.xlu0 %590
    %v592 = vsel %vm304, %v589, 0
    %v594 = vsel %vm304, %v591, 0
    %596 = vmatprep.subr.mxu0 0.0
    %597 = vmatpush1.msra.mxu0 %v579
    %598 = vmatprep.subr.mxu0 0.0
    %599 = vmatpush1.msra.mxu0 0.0
    %600 = vmatprep.subr.mxu0 0.0
    %601 = vmatpush1.msra.mxu0 0.0
    %602 = vmatprep.subr.mxu0 0.0
    %603 = vmatpush1.msra.mxu0 0.0
    %604 = vmatprep.subr.mxu0 0.0
    %605 = vmatpush1.msra.mxu0 0.0
    %606 = vmatprep.subr.mxu0 0.0
    %607 = vmatpush1.msra.mxu0 0.0
    %608 = vmatprep.subr.mxu0 0.0
    %609 = vmatpush1.msra.mxu0 0.0
    %610 = vmatprep.subr.mxu0 0.0
    %611 = vmatpush1.msra.mxu0 0.0
    %612 = vmatprep.subr.mxu0 0.0
    %613 = vmatpush1.msra.mxu0 0.0
    %614 = vmatprep.subr.mxu0 0.0
    %615 = vmatpush1.msra.mxu0 0.0
    %616 = vmatprep.subr.mxu0 0.0
    %617 = vmatpush1.msra.mxu0 0.0
    %618 = vmatprep.subr.mxu0 0.0
    %619 = vmatpush1.msra.mxu0 0.0
    %620 = vmatprep.subr.mxu0 0.0
    %621 = vmatpush1.msra.mxu0 0.0
    %622 = vmatprep.subr.mxu0 0.0
    %623 = vmatpush1.msra.mxu0 0.0
    %624 = vmatprep.subr.mxu0 0.0
    %625 = vmatpush1.msra.mxu0 0.0
    %626 = vmatprep.subr.mxu0 0.0
    %627 = vmatpush1.msra.mxu0 0.0
    %628 = vmatprep.subr.mxu0 0.0
    %629 = vmatpush1.msra.mxu0 0.0
    %630 = vmatprep.subr.mxu0 0.0
    %631 = vmatpush1.msra.mxu0 0.0
    %632 = vmatprep.subr.mxu0 0.0
    %633 = vmatpush1.msra.mxu0 0.0
    %634 = vmatprep.subr.mxu0 0.0
    %635 = vmatpush1.msra.mxu0 0.0
    %636 = vmatprep.subr.mxu0 0.0
    %637 = vmatpush1.msra.mxu0 0.0
    %638 = vmatprep.subr.mxu0 0.0
    %639 = vmatpush1.msra.mxu0 0.0
    %640 = vmatprep.subr.mxu0 0.0
    %641 = vmatpush1.msra.mxu0 0.0
    %642 = vmatprep.subr.mxu0 0.0
    %643 = vmatpush1.msra.mxu0 0.0
    %644 = vmatprep.subr.mxu0 0.0
    %645 = vmatpush1.msra.mxu0 0.0
    %646 = vmatprep.subr.mxu0 0.0
    %647 = vmatpush1.msra.mxu0 0.0
    %648 = vmatprep.subr.mxu0 0.0
    %649 = vmatpush1.msra.mxu0 0.0
    %650 = vmatprep.subr.mxu0 0.0
    %651 = vmatpush1.msra.mxu0 0.0
    %652 = vmatprep.subr.mxu0 0.0
    %653 = vmatpush1.msra.mxu0 0.0
    %654 = vmatprep.subr.mxu0 0.0
    %655 = vmatpush1.msra.mxu0 0.0
    %656 = vmatprep.subr.mxu0 0.0
    %657 = vmatpush1.msra.mxu0 0.0
    %658 = vmatprep.subr.mxu0 0.0
    %659 = vmatpush1.msra.mxu0 0.0
    %660 = vmatprep.mubr.f32.mxu0 0.0
    %661 = vmatmul.mubr.f32.gmra.mrb[0].mxu0 %v592
    %v662 = vpop.f32.mrb[0].mxu0
    %v663 = vadd.f32 %v586, %v662
    %v664 = vpop.f32.mrb[0].mxu0
    %665 = vmatprep.mubr.f32.mxu0 0.0
    %666 = vmatmul.mubr.f32.gmra.mrb[0].mxu0 %v594
    %v667 = vpop.f32.mrb[0].mxu0
    %v668 = vadd.f32 %v586, %v667
    %v669 = vpop.f32.mrb[0].mxu0
    %670 = vdwg.mxu0
    %v671 = vmul.f32 %v663, %v88
    %v672 = vmul.f32 %v668, %v89
    %v673 = vmul.f32 %v386, %v386
    %v674 = vmul.f32 %v387, %v387
    %v675 = vsel %vm97, %v673, 0.0
    %v676 = vsel %vm97, %v674, 0.0
    %v677 = vadd.f32 %v675, %v676
    %v678 = vrot.slane %v677, 4
    %v679 = vadd.f32 %v677, %v678
    %v680 = vrot.slane %v679, 2
    %v681 = vadd.f32 %v679, %v680
    %v682 = vrot.slane %v681, 1
    %v683 = vadd.f32 %v681, %v682
    %v684 = vmul.f32 %v386, %v481
    %v685 = vmul.f32 %v387, %v482
    %v686 = vsel %vm97, %v684, 0.0
    %v687 = vsel %vm97, %v685, 0.0
    %v688 = vadd.f32 %v686, %v687
    %v689 = vrot.slane %v688, 4
    %v690 = vadd.f32 %v688, %v689
    %v691 = vrot.slane %v690, 2
    %v692 = vadd.f32 %v690, %v691
    %v693 = vrot.slane %v692, 1
    %v694 = vadd.f32 %v692, %v693
    %v695 = vmul.f32 %v386, %v576
    %v696 = vmul.f32 %v387, %v577
    %v697 = vsel %vm97, %v695, 0.0
    %v698 = vsel %vm97, %v696, 0.0
    %v699 = vadd.f32 %v697, %v698
    %v700 = vrot.slane %v699, 4
    %v701 = vadd.f32 %v699, %v700
    %v702 = vrot.slane %v701, 2
    %v703 = vadd.f32 %v701, %v702
    %v704 = vrot.slane %v703, 1
    %v705 = vadd.f32 %v703, %v704
    %v706 = vmul.f32 %v386, %v671
    %v707 = vmul.f32 %v387, %v672
    %v708 = vsel %vm97, %v706, 0.0
    %v709 = vsel %vm97, %v707, 0.0
    %v710 = vadd.f32 %v708, %v709
    %v711 = vrot.slane %v710, 4
    %v712 = vadd.f32 %v710, %v711
    %v713 = vrot.slane %v712, 2
    %v714 = vadd.f32 %v712, %v713
    %v715 = vrot.slane %v714, 1
    %v716 = vadd.f32 %v714, %v715
    %v717 = vmul.f32 %v481, %v481
    %v718 = vmul.f32 %v482, %v482
    %v719 = vsel %vm97, %v717, 0.0
    %v720 = vsel %vm97, %v718, 0.0
    %v721 = vadd.f32 %v719, %v720
    %v722 = vrot.slane %v721, 4
    %v723 = vadd.f32 %v721, %v722
    %v724 = vrot.slane %v723, 2
    %v725 = vadd.f32 %v723, %v724
    %v726 = vrot.slane %v725, 1
    %v727 = vadd.f32 %v725, %v726
    %v728 = vmul.f32 %v481, %v576
    %v729 = vmul.f32 %v482, %v577
    %v730 = vsel %vm97, %v728, 0.0
    %v731 = vsel %vm97, %v729, 0.0
    %v732 = vadd.f32 %v730, %v731
    %v733 = vrot.slane %v732, 4
    %v734 = vadd.f32 %v732, %v733
    %v735 = vrot.slane %v734, 2
    %v736 = vadd.f32 %v734, %v735
    %v737 = vrot.slane %v736, 1
    %v738 = vadd.f32 %v736, %v737
    %v739 = vmul.f32 %v481, %v671
    %v740 = vmul.f32 %v482, %v672
    %v741 = vsel %vm97, %v739, 0.0
    %v742 = vsel %vm97, %v740, 0.0
    %v743 = vadd.f32 %v741, %v742
    %v744 = vrot.slane %v743, 4
    %v745 = vadd.f32 %v743, %v744
    %v746 = vrot.slane %v745, 2
    %v747 = vadd.f32 %v745, %v746
    %v748 = vrot.slane %v747, 1
    %v749 = vadd.f32 %v747, %v748
    %v750 = vmul.f32 %v576, %v576
    %v751 = vmul.f32 %v577, %v577
    %v752 = vsel %vm97, %v750, 0.0
    %v753 = vsel %vm97, %v751, 0.0
    %v754 = vadd.f32 %v752, %v753
    %v755 = vrot.slane %v754, 4
    %v756 = vadd.f32 %v754, %v755
    %v757 = vrot.slane %v756, 2
    %v758 = vadd.f32 %v756, %v757
    %v759 = vrot.slane %v758, 1
    %v760 = vadd.f32 %v758, %v759
    %v761 = vmul.f32 %v576, %v671
    %v762 = vmul.f32 %v577, %v672
    %v763 = vsel %vm97, %v761, 0.0
    %v764 = vsel %vm97, %v762, 0.0
    %v765 = vadd.f32 %v763, %v764
    %v766 = vrot.slane %v765, 4
    %v767 = vadd.f32 %v765, %v766
    %v768 = vrot.slane %v767, 2
    %v769 = vadd.f32 %v767, %v768
    %v770 = vrot.slane %v769, 1
    %v771 = vadd.f32 %v769, %v770
    %v772 = vmul.f32 %v671, %v671
    %v773 = vmul.f32 %v672, %v672
    %v774 = vsel %vm97, %v772, 0.0
    %v775 = vsel %vm97, %v773, 0.0
    %v776 = vadd.f32 %v774, %v775
    %v777 = vrot.slane %v776, 4
    %v778 = vadd.f32 %v776, %v777
    %v779 = vrot.slane %v778, 2
    %v780 = vadd.f32 %v778, %v779
    %v781 = vrot.slane %v780, 1
    %v782 = vadd.f32 %v780, %v781
    %vm783 = vcmask 1040384
    %v784 = vsel %vm783, %v683, %v694
    %vm785 = vcmask 1041408
    %v786 = vsel %vm785, %v784, %v705
    %vm787 = vcmask 1042432
    %v788 = vsel %vm787, %v786, %v716
    %vm789 = vcmask 1043456
    %v790 = vsel %vm789, %v788, %v694
    %vm791 = vcmask 1044480
    %v792 = vsel %vm791, %v790, %v727
    %vm793 = vcmask 1045504
    %v794 = vsel %vm793, %v792, %v738
    %vm795 = vcmask 1046528
    %v796 = vsel %vm795, %v794, %v749
    %v797 = vsel %vm783, %v705, %v738
    %v798 = vsel %vm785, %v797, %v760
    %v799 = vsel %vm787, %v798, %v771
    %v800 = vsel %vm789, %v799, %v716
    %v801 = vsel %vm791, %v800, %v749
    %v802 = vsel %vm793, %v801, %v771
    %v803 = vsel %vm795, %v802, %v782
    %804 = vst.msk [vmem:[#allocation11] sm:$0xff] %vm97, %v796
    %805 = vst.msk [vmem:[#allocation11 + $0x8] sm:$0xff] %vm97, %v803
    // Predicated region
    $region42: #{tpu_custom_call.1} parent=1 // pred_check
      _
    $region43: #{tpu_custom_call.1} parent=1 // pred_check_branch
      %807 = sbr.rel (0) target = $region45
    $region44: #{tpu_custom_call.1} parent=1 // pred_region
      %s809 = ssub.s32 64, 64
      %810 = vsyncadd [#allocation6], %s809
      %s812 = sshll.u32 [#allocation10], 4
      %s813 = int_to_ptr.vmem [resolvable:$true] %s812
      %815 = dma.vmem_to_hbm [thread:$0]  %s813, 64, %s8, [#allocation6]
    $region45: #{tpu_custom_call.1} parent=1 // pred_fallthru
      _
    // Predicated region
    $region46: #{tpu_custom_call.1} parent=1 // pred_check
      _
    $region47: #{tpu_custom_call.1} parent=1 // pred_check_branch
      %817 = sbr.rel (0) target = $region49
    $region48: #{tpu_custom_call.1} parent=1 // pred_region
      %s819 = ssub.s32 256, 256
      %820 = vsyncadd [#allocation12], %s819
      %s821 = sshll.u32 [#allocation11], 4
      %s822 = int_to_ptr.vmem [resolvable:$true] %s821
      %827 = dma.vmem_to_hbm [thread:$0]  %s822, 256, %s9, [#allocation12], 128, 128, 8
    $region49: #{tpu_custom_call.1} parent=1 // pred_fallthru
      _
    // Predicated region
    $region50: #{tpu_custom_call.1} parent=1 // pred_check
      _
    $region51: #{tpu_custom_call.1} parent=1 // pred_check_branch
      %829 = sbr.rel (0) target = $region53
    $region52: #{tpu_custom_call.1} parent=1 // pred_region
      %830 = dma.done [#allocation6], 64
    $region53: #{tpu_custom_call.1} parent=1 // pred_fallthru
      _
    // Predicated region
    $region54: #{tpu_custom_call.1} parent=1 // pred_check
      _
    $region55: #{tpu_custom_call.1} parent=1 // pred_check_branch
      %832 = sbr.rel (0) target = $region57
    $region56: #{tpu_custom_call.1} parent=1 // pred_region
      %833 = dma.done [#allocation12], 256
    $region57: #{tpu_custom_call.1} parent=1 // pred_fallthru
      _
    %834 = vsyncpa [#allocation5], 1
    %835 = vsyncpa [#allocation8], 1
    %836 = vsyncpa [#allocation6], 1
    %837 = vsyncpa [#allocation12], 1

</llo_original>
